<compile_context>
chip_gen: v7x
topology: tpu7x:2x2x1
jax: 0.10.0
libtpu: 0.0.40
codegen_flags: <defaults>
</compile_context>

<pallas_src>
import jax
import jax.numpy as jnp
from jax.experimental import pallas as pl
from jax.experimental.pallas import tpu as pltpu  # noqa: F401  (TPU backend)


def _copy_kernel(x_ref, o_ref):
    # Identity data-path: the torch op is a view, the only "work" is moving the
    # bytes through unchanged (single full-array block, one unmasked store).
    o_ref[...] = x_ref[...]


def view_add_pallas(x242, x240):
    """Reproduces M.forward: returns x240 reshaped to tuple(x242) + (12, 64)."""
    # tuple "add" (concatenation) — static shape glue, no Pallas equivalent needed
    x243 = tuple(x242) + (12, 64)

    b, s, h = x240.shape
    assert h == x243[-2] * x243[-1], "hidden dim must equal heads*head_dim"

    copied = pl.pallas_call(
        _copy_kernel,
        out_shape=jax.ShapeDtypeStruct((b, s, h), x240.dtype),
        grid=(1,),  # single step: the whole tensor fits in VMEM, overhead paid once
        in_specs=[
            pl.BlockSpec((pl.Squeezed(), s, h), lambda i: (0, 0, 0)),
        ],
        out_specs=pl.BlockSpec((pl.Squeezed(), s, h), lambda i: (0, 0, 0)),
        # Alias input 0 -> output 0 so XLA may reuse the input HBM buffer.
        input_output_aliases={0: 0},
    )(x240)

    # The actual `view`: pure metadata reshape, done in plain JAX (free in XLA).
    return copied.reshape(x243)


if __name__ == "__main__":
    key = jax.random.PRNGKey(0)
    # shapes implied by the module: x240 is [1, 384, 768], x242 = (1, 384)
    x240 = jax.random.normal(key, (1, 384, 768), dtype=jnp.float32)
    x242 = (1, 384)

    # pure-JAX reference of the view semantics
    ref = x240.reshape((1, 384, 12, 64))

    out = view_add_pallas(x242, x240)
    out = jax.block_until_ready(out)

    assert out.shape == (1, 384, 12, 64)
    assert out.dtype == x240.dtype
    assert bool(jnp.array_equal(out, ref))

    print("KERNEL_OK")
</pallas_src>

<mosaic_0001>
module attributes {stable_mosaic.version = 11 : i64} {
  func.func @_copy_kernel(%arg0: i32, %arg1: memref<1x384x768xf32, #tpu.memory_space<vmem>>, %arg2: memref<1x384x768xf32, #tpu.memory_space<vmem>>) attributes {dimension_semantics = [#tpu.dimension_semantics<arbitrary>], iteration_bounds = array<i64: 1>, scalar_prefetch = 0 : i64, scratch_operands = 0 : i64, tpu.core_type = #tpu.core_type<tc>, window_params = [{pipeline_mode = #tpu.pipeline_mode<synchronous>, transform_indices = @transform_0, window_bounds = array<i64: 1, 384, 768>}, {pipeline_mode = #tpu.pipeline_mode<synchronous>, transform_indices = @transform_1, window_bounds = array<i64: 1, 384, 768>}]} {
    %c0 = arith.constant 0 : index
    %c0_0 = arith.constant 0 : index
    %c0_1 = arith.constant 0 : index
    %0 = vector.load %arg1[%c0, %c0_0, %c0_1] : memref<1x384x768xf32, #tpu.memory_space<vmem>>, vector<1x384x768xf32>
    %1 = vector.shape_cast %0 : vector<1x384x768xf32> to vector<384x768xf32>
    %c0_2 = arith.constant 0 : index
    %c0_3 = arith.constant 0 : index
    %c0_4 = arith.constant 0 : index
    %2 = vector.load %arg2[%c0_2, %c0_3, %c0_4] : memref<1x384x768xf32, #tpu.memory_space<vmem>>, vector<1x384x768xf32>
    %3 = vector.shape_cast %2 : vector<1x384x768xf32> to vector<384x768xf32>
    %4 = vector.shape_cast %1 : vector<384x768xf32> to vector<1x384x768xf32>
    tpu.vector_store %arg2[%c0_2, %c0_3, %c0_4], %4 {strides = array<i32>} : memref<1x384x768xf32, #tpu.memory_space<vmem>>, vector<1x384x768xf32>,
    return
  }
  func.func @transform_0(%arg0: i32) -> (i32, i32, i32) {
    %c0_i32 = arith.constant 0 : i32
    %c0_i32_0 = arith.constant 0 : i32
    %c0_i32_1 = arith.constant 0 : i32
    %c0_i32_2 = arith.constant 0 : i32
    return %c0_i32, %c0_i32_0, %c0_i32_1 : i32, i32, i32
  }
  func.func @transform_1(%arg0: i32) -> (i32, i32, i32) {
    %c0_i32 = arith.constant 0 : i32
    %c0_i32_0 = arith.constant 0 : i32
    %c0_i32_1 = arith.constant 0 : i32
    %c0_i32_2 = arith.constant 0 : i32
    return %c0_i32, %c0_i32_0, %c0_i32_1 : i32, i32, i32
  }
}

</mosaic_0001>

<llo_original>
// kernel: tpu_custom_call.1
$region0: #{tpu_custom_call.1}
  #allocation0 [shape = 'u32[]', space=smem, size = 0x4, offset = 0x4, fixed_abs, tag = 'smem constant byte address 0x4 - core index']
  #allocation1 [shape = 'u32[144,128]{1,0:T(1,128)}', space=vmem, size = 0x12000, scoped, tag = 'internal scratch']
  %s0 = inlined_call_operand.hbm [shape: f32[1,384,768], index: 0, kind: input, shape index: {}, may-alias: {0,1}]
  %s1 = inlined_call_operand.hbm [shape: f32[1,384,768], index: 1, kind: output, shape index: {}, may-alias: {0,1}]
  %s2 = sld [smem:[#allocation0]]
  $region18: #{tpu_custom_call.1} parent=0
    _
  %s4 = ssub.s32 1, %s2
  %s5 = scalar_select 0, %s4, %s2
  $region1: #{tpu_custom_call.1} parent=0
    #allocation2 [shape = 'u8[1179648]{0}', space=vmem, size = 0x120000, scoped, tag = 'input window, operand 0, single buffered']
    #allocation3 [shape = 's32[1]{0}', space=sflag, size = 0x4, scoped, tag = 'scoped memory for tpu_custom_call.1']
    #allocation4 [shape = 's32[1]{0}', space=sflag, size = 0x4, scoped, tag = 'scoped memory for tpu_custom_call.1']
    #allocation5 [shape = 'u8[1179648]{0}', space=vmem, size = 0x120000, scoped, tag = 'output window, operand 0, single buffered']
    %6 = vsyncpa [#allocation3], 0
    %7 = vsyncpa [#allocation4], 0
    // Predicated region
    $region2: #{tpu_custom_call.1} parent=1 // pred_check
      _
    $region3: #{tpu_custom_call.1} parent=1 // pred_check_branch
      %9 = sbr.rel (0) target = $region5
    $region4: #{tpu_custom_call.1} parent=1 // pred_region
      %s11 = ssub.s32 36864, 36864
      %12 = vsyncadd [#allocation3], %s11
      %s13 = sshll.u32 [#allocation2], 4
      %s14 = int_to_ptr.vmem [resolvable:$true] %s13
      %19 = dma.hbm_to_vmem [thread:$0]  %s0, 36864, %s14, [#allocation3], 768, 768, 48
    $region5: #{tpu_custom_call.1} parent=1 // pred_fallthru
      _
    // Predicated region
    $region6: #{tpu_custom_call.1} parent=1 // pred_check
      _
    $region7: #{tpu_custom_call.1} parent=1 // pred_check_branch
      %21 = sbr.rel (0) target = $region9
    $region8: #{tpu_custom_call.1} parent=1 // pred_region
      %22 = dma.done [#allocation3], 36864
    $region9: #{tpu_custom_call.1} parent=1 // pred_fallthru
      _
    %v23 = vld [vmem:[#allocation2] sm:$0xff]
    %v24 = vld [vmem:[#allocation2 + $0x8] sm:$0xff]
    %v25 = vld [vmem:[#allocation2 + $0x10] sm:$0xff]
    %v26 = vld [vmem:[#allocation2 + $0x18] sm:$0xff]
    %v27 = vld [vmem:[#allocation2 + $0x20] sm:$0xff]
    %v28 = vld [vmem:[#allocation2 + $0x28] sm:$0xff]
    %v29 = vld [vmem:[#allocation2 + $0x30] sm:$0xff]
    %v30 = vld [vmem:[#allocation2 + $0x38] sm:$0xff]
    %v31 = vld [vmem:[#allocation2 + $0x40] sm:$0xff]
    %v32 = vld [vmem:[#allocation2 + $0x48] sm:$0xff]
    %v33 = vld [vmem:[#allocation2 + $0x50] sm:$0xff]
    %v34 = vld [vmem:[#allocation2 + $0x58] sm:$0xff]
    %v35 = vld [vmem:[#allocation2 + $0x60] sm:$0xff]
    %v36 = vld [vmem:[#allocation2 + $0x68] sm:$0xff]
    %v37 = vld [vmem:[#allocation2 + $0x70] sm:$0xff]
    %v38 = vld [vmem:[#allocation2 + $0x78] sm:$0xff]
    %v39 = vld [vmem:[#allocation2 + $0x80] sm:$0xff]
    %v40 = vld [vmem:[#allocation2 + $0x88] sm:$0xff]
    %v41 = vld [vmem:[#allocation2 + $0x90] sm:$0xff]
    %v42 = vld [vmem:[#allocation2 + $0x98] sm:$0xff]
    %v43 = vld [vmem:[#allocation2 + $0xa0] sm:$0xff]
    %v44 = vld [vmem:[#allocation2 + $0xa8] sm:$0xff]
    %v45 = vld [vmem:[#allocation2 + $0xb0] sm:$0xff]
    %v46 = vld [vmem:[#allocation2 + $0xb8] sm:$0xff]
    %v47 = vld [vmem:[#allocation2 + $0xc0] sm:$0xff]
    %v48 = vld [vmem:[#allocation2 + $0xc8] sm:$0xff]
    %v49 = vld [vmem:[#allocation2 + $0xd0] sm:$0xff]
    %v50 = vld [vmem:[#allocation2 + $0xd8] sm:$0xff]
    %v51 = vld [vmem:[#allocation2 + $0xe0] sm:$0xff]
    %v52 = vld [vmem:[#allocation2 + $0xe8] sm:$0xff]
    %v53 = vld [vmem:[#allocation2 + $0xf0] sm:$0xff]
    %v54 = vld [vmem:[#allocation2 + $0xf8] sm:$0xff]
    %v55 = vld [vmem:[#allocation2 + $0x100] sm:$0xff]
    %v56 = vld [vmem:[#allocation2 + $0x108] sm:$0xff]
    %v57 = vld [vmem:[#allocation2 + $0x110] sm:$0xff]
    %v58 = vld [vmem:[#allocation2 + $0x118] sm:$0xff]
    %v59 = vld [vmem:[#allocation2 + $0x120] sm:$0xff]
    %v60 = vld [vmem:[#allocation2 + $0x128] sm:$0xff]
    %v61 = vld [vmem:[#allocation2 + $0x130] sm:$0xff]
    %v62 = vld [vmem:[#allocation2 + $0x138] sm:$0xff]
    %v63 = vld [vmem:[#allocation2 + $0x140] sm:$0xff]
    %v64 = vld [vmem:[#allocation2 + $0x148] sm:$0xff]
    %v65 = vld [vmem:[#allocation2 + $0x150] sm:$0xff]
    %v66 = vld [vmem:[#allocation2 + $0x158] sm:$0xff]
    %v67 = vld [vmem:[#allocation2 + $0x160] sm:$0xff]
    %v68 = vld [vmem:[#allocation2 + $0x168] sm:$0xff]
    %v69 = vld [vmem:[#allocation2 + $0x170] sm:$0xff]
    %v70 = vld [vmem:[#allocation2 + $0x178] sm:$0xff]
    %v71 = vld [vmem:[#allocation2 + $0x180] sm:$0xff]
    %v72 = vld [vmem:[#allocation2 + $0x188] sm:$0xff]
    %v73 = vld [vmem:[#allocation2 + $0x190] sm:$0xff]
    %v74 = vld [vmem:[#allocation2 + $0x198] sm:$0xff]
    %v75 = vld [vmem:[#allocation2 + $0x1a0] sm:$0xff]
    %v76 = vld [vmem:[#allocation2 + $0x1a8] sm:$0xff]
    %v77 = vld [vmem:[#allocation2 + $0x1b0] sm:$0xff]
    %v78 = vld [vmem:[#allocation2 + $0x1b8] sm:$0xff]
    %v79 = vld [vmem:[#allocation2 + $0x1c0] sm:$0xff]
    %v80 = vld [vmem:[#allocation2 + $0x1c8] sm:$0xff]
    %v81 = vld [vmem:[#allocation2 + $0x1d0] sm:$0xff]
    %v82 = vld [vmem:[#allocation2 + $0x1d8] sm:$0xff]
    %v83 = vld [vmem:[#allocation2 + $0x1e0] sm:$0xff]
    %v84 = vld [vmem:[#allocation2 + $0x1e8] sm:$0xff]
    %v85 = vld [vmem:[#allocation2 + $0x1f0] sm:$0xff]
    %v86 = vld [vmem:[#allocation2 + $0x1f8] sm:$0xff]
    %v87 = vld [vmem:[#allocation2 + $0x200] sm:$0xff]
    %v88 = vld [vmem:[#allocation2 + $0x208] sm:$0xff]
    %v89 = vld [vmem:[#allocation2 + $0x210] sm:$0xff]
    %v90 = vld [vmem:[#allocation2 + $0x218] sm:$0xff]
    %v91 = vld [vmem:[#allocation2 + $0x220] sm:$0xff]
    %v92 = vld [vmem:[#allocation2 + $0x228] sm:$0xff]
    %v93 = vld [vmem:[#allocation2 + $0x230] sm:$0xff]
    %v94 = vld [vmem:[#allocation2 + $0x238] sm:$0xff]
    %v95 = vld [vmem:[#allocation2 + $0x240] sm:$0xff]
    %v96 = vld [vmem:[#allocation2 + $0x248] sm:$0xff]
    %v97 = vld [vmem:[#allocation2 + $0x250] sm:$0xff]
    %v98 = vld [vmem:[#allocation2 + $0x258] sm:$0xff]
    %v99 = vld [vmem:[#allocation2 + $0x260] sm:$0xff]
    %v100 = vld [vmem:[#allocation2 + $0x268] sm:$0xff]
    %v101 = vld [vmem:[#allocation2 + $0x270] sm:$0xff]
    %v102 = vld [vmem:[#allocation2 + $0x278] sm:$0xff]
    %v103 = vld [vmem:[#allocation2 + $0x280] sm:$0xff]
    %v104 = vld [vmem:[#allocation2 + $0x288] sm:$0xff]
    %v105 = vld [vmem:[#allocation2 + $0x290] sm:$0xff]
    %v106 = vld [vmem:[#allocation2 + $0x298] sm:$0xff]
    %v107 = vld [vmem:[#allocation2 + $0x2a0] sm:$0xff]
    %v108 = vld [vmem:[#allocation2 + $0x2a8] sm:$0xff]
    %v109 = vld [vmem:[#allocation2 + $0x2b0] sm:$0xff]
    %v110 = vld [vmem:[#allocation2 + $0x2b8] sm:$0xff]
    %v111 = vld [vmem:[#allocation2 + $0x2c0] sm:$0xff]
    %v112 = vld [vmem:[#allocation2 + $0x2c8] sm:$0xff]
    %v113 = vld [vmem:[#allocation2 + $0x2d0] sm:$0xff]
    %v114 = vld [vmem:[#allocation2 + $0x2d8] sm:$0xff]
    %v115 = vld [vmem:[#allocation2 + $0x2e0] sm:$0xff]
    %v116 = vld [vmem:[#allocation2 + $0x2e8] sm:$0xff]
    %v117 = vld [vmem:[#allocation2 + $0x2f0] sm:$0xff]
    %v118 = vld [vmem:[#allocation2 + $0x2f8] sm:$0xff]
    %v119 = vld [vmem:[#allocation2 + $0x300] sm:$0xff]
    %v120 = vld [vmem:[#allocation2 + $0x308] sm:$0xff]
    %v121 = vld [vmem:[#allocation2 + $0x310] sm:$0xff]
    %v122 = vld [vmem:[#allocation2 + $0x318] sm:$0xff]
    %v123 = vld [vmem:[#allocation2 + $0x320] sm:$0xff]
    %v124 = vld [vmem:[#allocation2 + $0x328] sm:$0xff]
    %v125 = vld [vmem:[#allocation2 + $0x330] sm:$0xff]
    %v126 = vld [vmem:[#allocation2 + $0x338] sm:$0xff]
    %v127 = vld [vmem:[#allocation2 + $0x340] sm:$0xff]
    %v128 = vld [vmem:[#allocation2 + $0x348] sm:$0xff]
    %v129 = vld [vmem:[#allocation2 + $0x350] sm:$0xff]
    %v130 = vld [vmem:[#allocation2 + $0x358] sm:$0xff]
    %v131 = vld [vmem:[#allocation2 + $0x360] sm:$0xff]
    %v132 = vld [vmem:[#allocation2 + $0x368] sm:$0xff]
    %v133 = vld [vmem:[#allocation2 + $0x370] sm:$0xff]
    %v134 = vld [vmem:[#allocation2 + $0x378] sm:$0xff]
    %v135 = vld [vmem:[#allocation2 + $0x380] sm:$0xff]
    %v136 = vld [vmem:[#allocation2 + $0x388] sm:$0xff]
    %v137 = vld [vmem:[#allocation2 + $0x390] sm:$0xff]
    %v138 = vld [vmem:[#allocation2 + $0x398] sm:$0xff]
    %v139 = vld [vmem:[#allocation2 + $0x3a0] sm:$0xff]
    %v140 = vld [vmem:[#allocation2 + $0x3a8] sm:$0xff]
    %v141 = vld [vmem:[#allocation2 + $0x3b0] sm:$0xff]
    %v142 = vld [vmem:[#allocation2 + $0x3b8] sm:$0xff]
    %v143 = vld [vmem:[#allocation2 + $0x3c0] sm:$0xff]
    %v144 = vld [vmem:[#allocation2 + $0x3c8] sm:$0xff]
    %v145 = vld [vmem:[#allocation2 + $0x3d0] sm:$0xff]
    %v146 = vld [vmem:[#allocation2 + $0x3d8] sm:$0xff]
    %v147 = vld [vmem:[#allocation2 + $0x3e0] sm:$0xff]
    %v148 = vld [vmem:[#allocation2 + $0x3e8] sm:$0xff]
    %v149 = vld [vmem:[#allocation2 + $0x3f0] sm:$0xff]
    %v150 = vld [vmem:[#allocation2 + $0x3f8] sm:$0xff]
    %v151 = vld [vmem:[#allocation2 + $0x400] sm:$0xff]
    %v152 = vld [vmem:[#allocation2 + $0x408] sm:$0xff]
    %v153 = vld [vmem:[#allocation2 + $0x410] sm:$0xff]
    %v154 = vld [vmem:[#allocation2 + $0x418] sm:$0xff]
    %v155 = vld [vmem:[#allocation2 + $0x420] sm:$0xff]
    %v156 = vld [vmem:[#allocation2 + $0x428] sm:$0xff]
    %v157 = vld [vmem:[#allocation2 + $0x430] sm:$0xff]
    %v158 = vld [vmem:[#allocation2 + $0x438] sm:$0xff]
    %v159 = vld [vmem:[#allocation2 + $0x440] sm:$0xff]
    %v160 = vld [vmem:[#allocation2 + $0x448] sm:$0xff]
    %v161 = vld [vmem:[#allocation2 + $0x450] sm:$0xff]
    %v162 = vld [vmem:[#allocation2 + $0x458] sm:$0xff]
    %v163 = vld [vmem:[#allocation2 + $0x460] sm:$0xff]
    %v164 = vld [vmem:[#allocation2 + $0x468] sm:$0xff]
    %v165 = vld [vmem:[#allocation2 + $0x470] sm:$0xff]
    %v166 = vld [vmem:[#allocation2 + $0x478] sm:$0xff]
    %v167 = vld [vmem:[#allocation2 + $0x480] sm:$0xff]
    %v168 = vld [vmem:[#allocation2 + $0x488] sm:$0xff]
    %v169 = vld [vmem:[#allocation2 + $0x490] sm:$0xff]
    %v170 = vld [vmem:[#allocation2 + $0x498] sm:$0xff]
    %v171 = vld [vmem:[#allocation2 + $0x4a0] sm:$0xff]
    %v172 = vld [vmem:[#allocation2 + $0x4a8] sm:$0xff]
    %v173 = vld [vmem:[#allocation2 + $0x4b0] sm:$0xff]
    %v174 = vld [vmem:[#allocation2 + $0x4b8] sm:$0xff]
    %v175 = vld [vmem:[#allocation2 + $0x4c0] sm:$0xff]
    %v176 = vld [vmem:[#allocation2 + $0x4c8] sm:$0xff]
    %v177 = vld [vmem:[#allocation2 + $0x4d0] sm:$0xff]
    %v178 = vld [vmem:[#allocation2 + $0x4d8] sm:$0xff]
    %v179 = vld [vmem:[#allocation2 + $0x4e0] sm:$0xff]
    %v180 = vld [vmem:[#allocation2 + $0x4e8] sm:$0xff]
    %v181 = vld [vmem:[#allocation2 + $0x4f0] sm:$0xff]
    %v182 = vld [vmem:[#allocation2 + $0x4f8] sm:$0xff]
    %v183 = vld [vmem:[#allocation2 + $0x500] sm:$0xff]
    %v184 = vld [vmem:[#allocation2 + $0x508] sm:$0xff]
    %v185 = vld [vmem:[#allocation2 + $0x510] sm:$0xff]
    %v186 = vld [vmem:[#allocation2 + $0x518] sm:$0xff]
    %v187 = vld [vmem:[#allocation2 + $0x520] sm:$0xff]
    %v188 = vld [vmem:[#allocation2 + $0x528] sm:$0xff]
    %v189 = vld [vmem:[#allocation2 + $0x530] sm:$0xff]
    %v190 = vld [vmem:[#allocation2 + $0x538] sm:$0xff]
    %v191 = vld [vmem:[#allocation2 + $0x540] sm:$0xff]
    %v192 = vld [vmem:[#allocation2 + $0x548] sm:$0xff]
    %v193 = vld [vmem:[#allocation2 + $0x550] sm:$0xff]
    %v194 = vld [vmem:[#allocation2 + $0x558] sm:$0xff]
    %v195 = vld [vmem:[#allocation2 + $0x560] sm:$0xff]
    %v196 = vld [vmem:[#allocation2 + $0x568] sm:$0xff]
    %v197 = vld [vmem:[#allocation2 + $0x570] sm:$0xff]
    %v198 = vld [vmem:[#allocation2 + $0x578] sm:$0xff]
    %v199 = vld [vmem:[#allocation2 + $0x580] sm:$0xff]
    %v200 = vld [vmem:[#allocation2 + $0x588] sm:$0xff]
    %v201 = vld [vmem:[#allocation2 + $0x590] sm:$0xff]
    %v202 = vld [vmem:[#allocation2 + $0x598] sm:$0xff]
    %v203 = vld [vmem:[#allocation2 + $0x5a0] sm:$0xff]
    %v204 = vld [vmem:[#allocation2 + $0x5a8] sm:$0xff]
    %v205 = vld [vmem:[#allocation2 + $0x5b0] sm:$0xff]
    %v206 = vld [vmem:[#allocation2 + $0x5b8] sm:$0xff]
    %v207 = vld [vmem:[#allocation2 + $0x5c0] sm:$0xff]
    %v208 = vld [vmem:[#allocation2 + $0x5c8] sm:$0xff]
    %v209 = vld [vmem:[#allocation2 + $0x5d0] sm:$0xff]
    %v210 = vld [vmem:[#allocation2 + $0x5d8] sm:$0xff]
    %v211 = vld [vmem:[#allocation2 + $0x5e0] sm:$0xff]
    %v212 = vld [vmem:[#allocation2 + $0x5e8] sm:$0xff]
    %v213 = vld [vmem:[#allocation2 + $0x5f0] sm:$0xff]
    %v214 = vld [vmem:[#allocation2 + $0x5f8] sm:$0xff]
    %v215 = vld [vmem:[#allocation2 + $0x600] sm:$0xff]
    %v216 = vld [vmem:[#allocation2 + $0x608] sm:$0xff]
    %v217 = vld [vmem:[#allocation2 + $0x610] sm:$0xff]
    %v218 = vld [vmem:[#allocation2 + $0x618] sm:$0xff]
    %v219 = vld [vmem:[#allocation2 + $0x620] sm:$0xff]
    %v220 = vld [vmem:[#allocation2 + $0x628] sm:$0xff]
    %v221 = vld [vmem:[#allocation2 + $0x630] sm:$0xff]
    %v222 = vld [vmem:[#allocation2 + $0x638] sm:$0xff]
    %v223 = vld [vmem:[#allocation2 + $0x640] sm:$0xff]
    %v224 = vld [vmem:[#allocation2 + $0x648] sm:$0xff]
    %v225 = vld [vmem:[#allocation2 + $0x650] sm:$0xff]
    %v226 = vld [vmem:[#allocation2 + $0x658] sm:$0xff]
    %v227 = vld [vmem:[#allocation2 + $0x660] sm:$0xff]
    %v228 = vld [vmem:[#allocation2 + $0x668] sm:$0xff]
    %v229 = vld [vmem:[#allocation2 + $0x670] sm:$0xff]
    %v230 = vld [vmem:[#allocation2 + $0x678] sm:$0xff]
    %v231 = vld [vmem:[#allocation2 + $0x680] sm:$0xff]
    %v232 = vld [vmem:[#allocation2 + $0x688] sm:$0xff]
    %v233 = vld [vmem:[#allocation2 + $0x690] sm:$0xff]
    %v234 = vld [vmem:[#allocation2 + $0x698] sm:$0xff]
    %v235 = vld [vmem:[#allocation2 + $0x6a0] sm:$0xff]
    %v236 = vld [vmem:[#allocation2 + $0x6a8] sm:$0xff]
    %v237 = vld [vmem:[#allocation2 + $0x6b0] sm:$0xff]
    %v238 = vld [vmem:[#allocation2 + $0x6b8] sm:$0xff]
    %v239 = vld [vmem:[#allocation2 + $0x6c0] sm:$0xff]
    %v240 = vld [vmem:[#allocation2 + $0x6c8] sm:$0xff]
    %v241 = vld [vmem:[#allocation2 + $0x6d0] sm:$0xff]
    %v242 = vld [vmem:[#allocation2 + $0x6d8] sm:$0xff]
    %v243 = vld [vmem:[#allocation2 + $0x6e0] sm:$0xff]
    %v244 = vld [vmem:[#allocation2 + $0x6e8] sm:$0xff]
    %v245 = vld [vmem:[#allocation2 + $0x6f0] sm:$0xff]
    %v246 = vld [vmem:[#allocation2 + $0x6f8] sm:$0xff]
    %v247 = vld [vmem:[#allocation2 + $0x700] sm:$0xff]
    %v248 = vld [vmem:[#allocation2 + $0x708] sm:$0xff]
    %v249 = vld [vmem:[#allocation2 + $0x710] sm:$0xff]
    %v250 = vld [vmem:[#allocation2 + $0x718] sm:$0xff]
    %v251 = vld [vmem:[#allocation2 + $0x720] sm:$0xff]
    %v252 = vld [vmem:[#allocation2 + $0x728] sm:$0xff]
    %v253 = vld [vmem:[#allocation2 + $0x730] sm:$0xff]
    %v254 = vld [vmem:[#allocation2 + $0x738] sm:$0xff]
    %v255 = vld [vmem:[#allocation2 + $0x740] sm:$0xff]
    %v256 = vld [vmem:[#allocation2 + $0x748] sm:$0xff]
    %v257 = vld [vmem:[#allocation2 + $0x750] sm:$0xff]
    %v258 = vld [vmem:[#allocation2 + $0x758] sm:$0xff]
    %v259 = vld [vmem:[#allocation2 + $0x760] sm:$0xff]
    %v260 = vld [vmem:[#allocation2 + $0x768] sm:$0xff]
    %v261 = vld [vmem:[#allocation2 + $0x770] sm:$0xff]
    %v262 = vld [vmem:[#allocation2 + $0x778] sm:$0xff]
    %v263 = vld [vmem:[#allocation2 + $0x780] sm:$0xff]
    %v264 = vld [vmem:[#allocation2 + $0x788] sm:$0xff]
    %v265 = vld [vmem:[#allocation2 + $0x790] sm:$0xff]
    %v266 = vld [vmem:[#allocation2 + $0x798] sm:$0xff]
    %v267 = vld [vmem:[#allocation2 + $0x7a0] sm:$0xff]
    %v268 = vld [vmem:[#allocation2 + $0x7a8] sm:$0xff]
    %v269 = vld [vmem:[#allocation2 + $0x7b0] sm:$0xff]
    %v270 = vld [vmem:[#allocation2 + $0x7b8] sm:$0xff]
    %v271 = vld [vmem:[#allocation2 + $0x7c0] sm:$0xff]
    %v272 = vld [vmem:[#allocation2 + $0x7c8] sm:$0xff]
    %v273 = vld [vmem:[#allocation2 + $0x7d0] sm:$0xff]
    %v274 = vld [vmem:[#allocation2 + $0x7d8] sm:$0xff]
    %v275 = vld [vmem:[#allocation2 + $0x7e0] sm:$0xff]
    %v276 = vld [vmem:[#allocation2 + $0x7e8] sm:$0xff]
    %v277 = vld [vmem:[#allocation2 + $0x7f0] sm:$0xff]
    %v278 = vld [vmem:[#allocation2 + $0x7f8] sm:$0xff]
    %v279 = vld [vmem:[#allocation2 + $0x800] sm:$0xff]
    %v280 = vld [vmem:[#allocation2 + $0x808] sm:$0xff]
    %v281 = vld [vmem:[#allocation2 + $0x810] sm:$0xff]
    %v282 = vld [vmem:[#allocation2 + $0x818] sm:$0xff]
    %v283 = vld [vmem:[#allocation2 + $0x820] sm:$0xff]
    %v284 = vld [vmem:[#allocation2 + $0x828] sm:$0xff]
    %v285 = vld [vmem:[#allocation2 + $0x830] sm:$0xff]
    %v286 = vld [vmem:[#allocation2 + $0x838] sm:$0xff]
    %v287 = vld [vmem:[#allocation2 + $0x840] sm:$0xff]
    %v288 = vld [vmem:[#allocation2 + $0x848] sm:$0xff]
    %v289 = vld [vmem:[#allocation2 + $0x850] sm:$0xff]
    %v290 = vld [vmem:[#allocation2 + $0x858] sm:$0xff]
    %v291 = vld [vmem:[#allocation2 + $0x860] sm:$0xff]
    %v292 = vld [vmem:[#allocation2 + $0x868] sm:$0xff]
    %v293 = vld [vmem:[#allocation2 + $0x870] sm:$0xff]
    %v294 = vld [vmem:[#allocation2 + $0x878] sm:$0xff]
    %v295 = vld [vmem:[#allocation2 + $0x880] sm:$0xff]
    %v296 = vld [vmem:[#allocation2 + $0x888] sm:$0xff]
    %v297 = vld [vmem:[#allocation2 + $0x890] sm:$0xff]
    %v298 = vld [vmem:[#allocation2 + $0x898] sm:$0xff]
    %v299 = vld [vmem:[#allocation2 + $0x8a0] sm:$0xff]
    %v300 = vld [vmem:[#allocation2 + $0x8a8] sm:$0xff]
    %v301 = vld [vmem:[#allocation2 + $0x8b0] sm:$0xff]
    %v302 = vld [vmem:[#allocation2 + $0x8b8] sm:$0xff]
    %v303 = vld [vmem:[#allocation2 + $0x8c0] sm:$0xff]
    %v304 = vld [vmem:[#allocation2 + $0x8c8] sm:$0xff]
    %v305 = vld [vmem:[#allocation2 + $0x8d0] sm:$0xff]
    %v306 = vld [vmem:[#allocation2 + $0x8d8] sm:$0xff]
    %v307 = vld [vmem:[#allocation2 + $0x8e0] sm:$0xff]
    %v308 = vld [vmem:[#allocation2 + $0x8e8] sm:$0xff]
    %v309 = vld [vmem:[#allocation2 + $0x8f0] sm:$0xff]
    %v310 = vld [vmem:[#allocation2 + $0x8f8] sm:$0xff]
    %311 = vst [vmem:[#allocation5] sm:$0xff] %v23
    %312 = vst [vmem:[#allocation5 + $0x8] sm:$0xff] %v24
    %313 = vst [vmem:[#allocation5 + $0x10] sm:$0xff] %v25
    %314 = vst [vmem:[#allocation5 + $0x18] sm:$0xff] %v26
    %315 = vst [vmem:[#allocation5 + $0x20] sm:$0xff] %v27
    %316 = vst [vmem:[#allocation5 + $0x28] sm:$0xff] %v28
    %317 = vst [vmem:[#allocation5 + $0x30] sm:$0xff] %v29
    %318 = vst [vmem:[#allocation5 + $0x38] sm:$0xff] %v30
    %319 = vst [vmem:[#allocation5 + $0x40] sm:$0xff] %v31
    %320 = vst [vmem:[#allocation5 + $0x48] sm:$0xff] %v32
    %321 = vst [vmem:[#allocation5 + $0x50] sm:$0xff] %v33
    %322 = vst [vmem:[#allocation5 + $0x58] sm:$0xff] %v34
    %323 = vst [vmem:[#allocation5 + $0x60] sm:$0xff] %v35
    %324 = vst [vmem:[#allocation5 + $0x68] sm:$0xff] %v36
    %325 = vst [vmem:[#allocation5 + $0x70] sm:$0xff] %v37
    %326 = vst [vmem:[#allocation5 + $0x78] sm:$0xff] %v38
    %327 = vst [vmem:[#allocation5 + $0x80] sm:$0xff] %v39
    %328 = vst [vmem:[#allocation5 + $0x88] sm:$0xff] %v40
    %329 = vst [vmem:[#allocation5 + $0x90] sm:$0xff] %v41
    %330 = vst [vmem:[#allocation5 + $0x98] sm:$0xff] %v42
    %331 = vst [vmem:[#allocation5 + $0xa0] sm:$0xff] %v43
    %332 = vst [vmem:[#allocation5 + $0xa8] sm:$0xff] %v44
    %333 = vst [vmem:[#allocation5 + $0xb0] sm:$0xff] %v45
    %334 = vst [vmem:[#allocation5 + $0xb8] sm:$0xff] %v46
    %335 = vst [vmem:[#allocation5 + $0xc0] sm:$0xff] %v47
    %336 = vst [vmem:[#allocation5 + $0xc8] sm:$0xff] %v48
    %337 = vst [vmem:[#allocation5 + $0xd0] sm:$0xff] %v49
    %338 = vst [vmem:[#allocation5 + $0xd8] sm:$0xff] %v50
    %339 = vst [vmem:[#allocation5 + $0xe0] sm:$0xff] %v51
    %340 = vst [vmem:[#allocation5 + $0xe8] sm:$0xff] %v52
    %341 = vst [vmem:[#allocation5 + $0xf0] sm:$0xff] %v53
    %342 = vst [vmem:[#allocation5 + $0xf8] sm:$0xff] %v54
    %343 = vst [vmem:[#allocation5 + $0x100] sm:$0xff] %v55
    %344 = vst [vmem:[#allocation5 + $0x108] sm:$0xff] %v56
    %345 = vst [vmem:[#allocation5 + $0x110] sm:$0xff] %v57
    %346 = vst [vmem:[#allocation5 + $0x118] sm:$0xff] %v58
    %347 = vst [vmem:[#allocation5 + $0x120] sm:$0xff] %v59
    %348 = vst [vmem:[#allocation5 + $0x128] sm:$0xff] %v60
    %349 = vst [vmem:[#allocation5 + $0x130] sm:$0xff] %v61
    %350 = vst [vmem:[#allocation5 + $0x138] sm:$0xff] %v62
    %351 = vst [vmem:[#allocation5 + $0x140] sm:$0xff] %v63
    %352 = vst [vmem:[#allocation5 + $0x148] sm:$0xff] %v64
    %353 = vst [vmem:[#allocation5 + $0x150] sm:$0xff] %v65
    %354 = vst [vmem:[#allocation5 + $0x158] sm:$0xff] %v66
    %355 = vst [vmem:[#allocation5 + $0x160] sm:$0xff] %v67
    %356 = vst [vmem:[#allocation5 + $0x168] sm:$0xff] %v68
    %357 = vst [vmem:[#allocation5 + $0x170] sm:$0xff] %v69
    %358 = vst [vmem:[#allocation5 + $0x178] sm:$0xff] %v70
    %359 = vst [vmem:[#allocation5 + $0x180] sm:$0xff] %v71
    %360 = vst [vmem:[#allocation5 + $0x188] sm:$0xff] %v72
    %361 = vst [vmem:[#allocation5 + $0x190] sm:$0xff] %v73
    %362 = vst [vmem:[#allocation5 + $0x198] sm:$0xff] %v74
    %363 = vst [vmem:[#allocation5 + $0x1a0] sm:$0xff] %v75
    %364 = vst [vmem:[#allocation5 + $0x1a8] sm:$0xff] %v76
    %365 = vst [vmem:[#allocation5 + $0x1b0] sm:$0xff] %v77
    %366 = vst [vmem:[#allocation5 + $0x1b8] sm:$0xff] %v78
    %367 = vst [vmem:[#allocation5 + $0x1c0] sm:$0xff] %v79
    %368 = vst [vmem:[#allocation5 + $0x1c8] sm:$0xff] %v80
    %369 = vst [vmem:[#allocation5 + $0x1d0] sm:$0xff] %v81
    %370 = vst [vmem:[#allocation5 + $0x1d8] sm:$0xff] %v82
    %371 = vst [vmem:[#allocation5 + $0x1e0] sm:$0xff] %v83
    %372 = vst [vmem:[#allocation5 + $0x1e8] sm:$0xff] %v84
    %373 = vst [vmem:[#allocation5 + $0x1f0] sm:$0xff] %v85
    %374 = vst [vmem:[#allocation5 + $0x1f8] sm:$0xff] %v86
    %375 = vst [vmem:[#allocation5 + $0x200] sm:$0xff] %v87
    %376 = vst [vmem:[#allocation5 + $0x208] sm:$0xff] %v88
    %377 = vst [vmem:[#allocation5 + $0x210] sm:$0xff] %v89
    %378 = vst [vmem:[#allocation5 + $0x218] sm:$0xff] %v90
    %379 = vst [vmem:[#allocation5 + $0x220] sm:$0xff] %v91
    %380 = vst [vmem:[#allocation5 + $0x228] sm:$0xff] %v92
    %381 = vst [vmem:[#allocation5 + $0x230] sm:$0xff] %v93
    %382 = vst [vmem:[#allocation5 + $0x238] sm:$0xff] %v94
    %383 = vst [vmem:[#allocation5 + $0x240] sm:$0xff] %v95
    %384 = vst [vmem:[#allocation5 + $0x248] sm:$0xff] %v96
    %385 = vst [vmem:[#allocation5 + $0x250] sm:$0xff] %v97
    %386 = vst [vmem:[#allocation5 + $0x258] sm:$0xff] %v98
    %387 = vst [vmem:[#allocation5 + $0x260] sm:$0xff] %v99
    %388 = vst [vmem:[#allocation5 + $0x268] sm:$0xff] %v100
    %389 = vst [vmem:[#allocation5 + $0x270] sm:$0xff] %v101
    %390 = vst [vmem:[#allocation5 + $0x278] sm:$0xff] %v102
    %391 = vst [vmem:[#allocation5 + $0x280] sm:$0xff] %v103
    %392 = vst [vmem:[#allocation5 + $0x288] sm:$0xff] %v104
    %393 = vst [vmem:[#allocation5 + $0x290] sm:$0xff] %v105
    %394 = vst [vmem:[#allocation5 + $0x298] sm:$0xff] %v106
    %395 = vst [vmem:[#allocation5 + $0x2a0] sm:$0xff] %v107
    %396 = vst [vmem:[#allocation5 + $0x2a8] sm:$0xff] %v108
    %397 = vst [vmem:[#allocation5 + $0x2b0] sm:$0xff] %v109
    %398 = vst [vmem:[#allocation5 + $0x2b8] sm:$0xff] %v110
    %399 = vst [vmem:[#allocation5 + $0x2c0] sm:$0xff] %v111
    %400 = vst [vmem:[#allocation5 + $0x2c8] sm:$0xff] %v112
    %401 = vst [vmem:[#allocation5 + $0x2d0] sm:$0xff] %v113
    %402 = vst [vmem:[#allocation5 + $0x2d8] sm:$0xff] %v114
    %403 = vst [vmem:[#allocation5 + $0x2e0] sm:$0xff] %v115
    %404 = vst [vmem:[#allocation5 + $0x2e8] sm:$0xff] %v116
    %405 = vst [vmem:[#allocation5 + $0x2f0] sm:$0xff] %v117
    %406 = vst [vmem:[#allocation5 + $0x2f8] sm:$0xff] %v118
    %407 = vst [vmem:[#allocation5 + $0x300] sm:$0xff] %v119
    %408 = vst [vmem:[#allocation5 + $0x308] sm:$0xff] %v120
    %409 = vst [vmem:[#allocation5 + $0x310] sm:$0xff] %v121
    %410 = vst [vmem:[#allocation5 + $0x318] sm:$0xff] %v122
    %411 = vst [vmem:[#allocation5 + $0x320] sm:$0xff] %v123
    %412 = vst [vmem:[#allocation5 + $0x328] sm:$0xff] %v124
    %413 = vst [vmem:[#allocation5 + $0x330] sm:$0xff] %v125
    %414 = vst [vmem:[#allocation5 + $0x338] sm:$0xff] %v126
    %415 = vst [vmem:[#allocation5 + $0x340] sm:$0xff] %v127
    %416 = vst [vmem:[#allocation5 + $0x348] sm:$0xff] %v128
    %417 = vst [vmem:[#allocation5 + $0x350] sm:$0xff] %v129
    %418 = vst [vmem:[#allocation5 + $0x358] sm:$0xff] %v130
    %419 = vst [vmem:[#allocation5 + $0x360] sm:$0xff] %v131
    %420 = vst [vmem:[#allocation5 + $0x368] sm:$0xff] %v132
    %421 = vst [vmem:[#allocation5 + $0x370] sm:$0xff] %v133
    %422 = vst [vmem:[#allocation5 + $0x378] sm:$0xff] %v134
    %423 = vst [vmem:[#allocation5 + $0x380] sm:$0xff] %v135
    %424 = vst [vmem:[#allocation5 + $0x388] sm:$0xff] %v136
    %425 = vst [vmem:[#allocation5 + $0x390] sm:$0xff] %v137
    %426 = vst [vmem:[#allocation5 + $0x398] sm:$0xff] %v138
    %427 = vst [vmem:[#allocation5 + $0x3a0] sm:$0xff] %v139
    %428 = vst [vmem:[#allocation5 + $0x3a8] sm:$0xff] %v140
    %429 = vst [vmem:[#allocation5 + $0x3b0] sm:$0xff] %v141
    %430 = vst [vmem:[#allocation5 + $0x3b8] sm:$0xff] %v142
    %431 = vst [vmem:[#allocation5 + $0x3c0] sm:$0xff] %v143
    %432 = vst [vmem:[#allocation5 + $0x3c8] sm:$0xff] %v144
    %433 = vst [vmem:[#allocation5 + $0x3d0] sm:$0xff] %v145
    %434 = vst [vmem:[#allocation5 + $0x3d8] sm:$0xff] %v146
    %435 = vst [vmem:[#allocation5 + $0x3e0] sm:$0xff] %v147
    %436 = vst [vmem:[#allocation5 + $0x3e8] sm:$0xff] %v148
    %437 = vst [vmem:[#allocation5 + $0x3f0] sm:$0xff] %v149
    %438 = vst [vmem:[#allocation5 + $0x3f8] sm:$0xff] %v150
    %439 = vst [vmem:[#allocation5 + $0x400] sm:$0xff] %v151
    %440 = vst [vmem:[#allocation5 + $0x408] sm:$0xff] %v152
    %441 = vst [vmem:[#allocation5 + $0x410] sm:$0xff] %v153
    %442 = vst [vmem:[#allocation5 + $0x418] sm:$0xff] %v154
    %443 = vst [vmem:[#allocation5 + $0x420] sm:$0xff] %v155
    %444 = vst [vmem:[#allocation5 + $0x428] sm:$0xff] %v156
    %445 = vst [vmem:[#allocation5 + $0x430] sm:$0xff] %v157
    %446 = vst [vmem:[#allocation5 + $0x438] sm:$0xff] %v158
    %447 = vst [vmem:[#allocation5 + $0x440] sm:$0xff] %v159
    %448 = vst [vmem:[#allocation5 + $0x448] sm:$0xff] %v160
    %449 = vst [vmem:[#allocation5 + $0x450] sm:$0xff] %v161
    %450 = vst [vmem:[#allocation5 + $0x458] sm:$0xff] %v162
    %451 = vst [vmem:[#allocation5 + $0x460] sm:$0xff] %v163
    %452 = vst [vmem:[#allocation5 + $0x468] sm:$0xff] %v164
    %453 = vst [vmem:[#allocation5 + $0x470] sm:$0xff] %v165
    %454 = vst [vmem:[#allocation5 + $0x478] sm:$0xff] %v166
    %455 = vst [vmem:[#allocation5 + $0x480] sm:$0xff] %v167
    %456 = vst [vmem:[#allocation5 + $0x488] sm:$0xff] %v168
    %457 = vst [vmem:[#allocation5 + $0x490] sm:$0xff] %v169
    %458 = vst [vmem:[#allocation5 + $0x498] sm:$0xff] %v170
    %459 = vst [vmem:[#allocation5 + $0x4a0] sm:$0xff] %v171
    %460 = vst [vmem:[#allocation5 + $0x4a8] sm:$0xff] %v172
    %461 = vst [vmem:[#allocation5 + $0x4b0] sm:$0xff] %v173
    %462 = vst [vmem:[#allocation5 + $0x4b8] sm:$0xff] %v174
    %463 = vst [vmem:[#allocation5 + $0x4c0] sm:$0xff] %v175
    %464 = vst [vmem:[#allocation5 + $0x4c8] sm:$0xff] %v176
    %465 = vst [vmem:[#allocation5 + $0x4d0] sm:$0xff] %v177
    %466 = vst [vmem:[#allocation5 + $0x4d8] sm:$0xff] %v178
    %467 = vst [vmem:[#allocation5 + $0x4e0] sm:$0xff] %v179
    %468 = vst [vmem:[#allocation5 + $0x4e8] sm:$0xff] %v180
    %469 = vst [vmem:[#allocation5 + $0x4f0] sm:$0xff] %v181
    %470 = vst [vmem:[#allocation5 + $0x4f8] sm:$0xff] %v182
    %471 = vst [vmem:[#allocation5 + $0x500] sm:$0xff] %v183
    %472 = vst [vmem:[#allocation5 + $0x508] sm:$0xff] %v184
    %473 = vst [vmem:[#allocation5 + $0x510] sm:$0xff] %v185
    %474 = vst [vmem:[#allocation5 + $0x518] sm:$0xff] %v186
    %475 = vst [vmem:[#allocation5 + $0x520] sm:$0xff] %v187
    %476 = vst [vmem:[#allocation5 + $0x528] sm:$0xff] %v188
    %477 = vst [vmem:[#allocation5 + $0x530] sm:$0xff] %v189
    %478 = vst [vmem:[#allocation5 + $0x538] sm:$0xff] %v190
    %479 = vst [vmem:[#allocation5 + $0x540] sm:$0xff] %v191
    %480 = vst [vmem:[#allocation5 + $0x548] sm:$0xff] %v192
    %481 = vst [vmem:[#allocation5 + $0x550] sm:$0xff] %v193
    %482 = vst [vmem:[#allocation5 + $0x558] sm:$0xff] %v194
    %483 = vst [vmem:[#allocation5 + $0x560] sm:$0xff] %v195
    %484 = vst [vmem:[#allocation5 + $0x568] sm:$0xff] %v196
    %485 = vst [vmem:[#allocation5 + $0x570] sm:$0xff] %v197
    %486 = vst [vmem:[#allocation5 + $0x578] sm:$0xff] %v198
    %487 = vst [vmem:[#allocation5 + $0x580] sm:$0xff] %v199
    %488 = vst [vmem:[#allocation5 + $0x588] sm:$0xff] %v200
    %489 = vst [vmem:[#allocation5 + $0x590] sm:$0xff] %v201
    %490 = vst [vmem:[#allocation5 + $0x598] sm:$0xff] %v202
    %491 = vst [vmem:[#allocation5 + $0x5a0] sm:$0xff] %v203
    %492 = vst [vmem:[#allocation5 + $0x5a8] sm:$0xff] %v204
    %493 = vst [vmem:[#allocation5 + $0x5b0] sm:$0xff] %v205
    %494 = vst [vmem:[#allocation5 + $0x5b8] sm:$0xff] %v206
    %495 = vst [vmem:[#allocation5 + $0x5c0] sm:$0xff] %v207
    %496 = vst [vmem:[#allocation5 + $0x5c8] sm:$0xff] %v208
    %497 = vst [vmem:[#allocation5 + $0x5d0] sm:$0xff] %v209
    %498 = vst [vmem:[#allocation5 + $0x5d8] sm:$0xff] %v210
    %499 = vst [vmem:[#allocation5 + $0x5e0] sm:$0xff] %v211
    %500 = vst [vmem:[#allocation5 + $0x5e8] sm:$0xff] %v212
    %501 = vst [vmem:[#allocation5 + $0x5f0] sm:$0xff] %v213
    %502 = vst [vmem:[#allocation5 + $0x5f8] sm:$0xff] %v214
    %503 = vst [vmem:[#allocation5 + $0x600] sm:$0xff] %v215
    %504 = vst [vmem:[#allocation5 + $0x608] sm:$0xff] %v216
    %505 = vst [vmem:[#allocation5 + $0x610] sm:$0xff] %v217
    %506 = vst [vmem:[#allocation5 + $0x618] sm:$0xff] %v218
    %507 = vst [vmem:[#allocation5 + $0x620] sm:$0xff] %v219
    %508 = vst [vmem:[#allocation5 + $0x628] sm:$0xff] %v220
    %509 = vst [vmem:[#allocation5 + $0x630] sm:$0xff] %v221
    %510 = vst [vmem:[#allocation5 + $0x638] sm:$0xff] %v222
    %511 = vst [vmem:[#allocation5 + $0x640] sm:$0xff] %v223
    %512 = vst [vmem:[#allocation5 + $0x648] sm:$0xff] %v224
    %513 = vst [vmem:[#allocation5 + $0x650] sm:$0xff] %v225
    %514 = vst [vmem:[#allocation5 + $0x658] sm:$0xff] %v226
    %515 = vst [vmem:[#allocation5 + $0x660] sm:$0xff] %v227
    %516 = vst [vmem:[#allocation5 + $0x668] sm:$0xff] %v228
    %517 = vst [vmem:[#allocation5 + $0x670] sm:$0xff] %v229
    %518 = vst [vmem:[#allocation5 + $0x678] sm:$0xff] %v230
    %519 = vst [vmem:[#allocation5 + $0x680] sm:$0xff] %v231
    %520 = vst [vmem:[#allocation5 + $0x688] sm:$0xff] %v232
    %521 = vst [vmem:[#allocation5 + $0x690] sm:$0xff] %v233
    %522 = vst [vmem:[#allocation5 + $0x698] sm:$0xff] %v234
    %523 = vst [vmem:[#allocation5 + $0x6a0] sm:$0xff] %v235
    %524 = vst [vmem:[#allocation5 + $0x6a8] sm:$0xff] %v236
    %525 = vst [vmem:[#allocation5 + $0x6b0] sm:$0xff] %v237
    %526 = vst [vmem:[#allocation5 + $0x6b8] sm:$0xff] %v238
    %527 = vst [vmem:[#allocation5 + $0x6c0] sm:$0xff] %v239
    %528 = vst [vmem:[#allocation5 + $0x6c8] sm:$0xff] %v240
    %529 = vst [vmem:[#allocation5 + $0x6d0] sm:$0xff] %v241
    %530 = vst [vmem:[#allocation5 + $0x6d8] sm:$0xff] %v242
    %531 = vst [vmem:[#allocation5 + $0x6e0] sm:$0xff] %v243
    %532 = vst [vmem:[#allocation5 + $0x6e8] sm:$0xff] %v244
    %533 = vst [vmem:[#allocation5 + $0x6f0] sm:$0xff] %v245
    %534 = vst [vmem:[#allocation5 + $0x6f8] sm:$0xff] %v246
    %535 = vst [vmem:[#allocation5 + $0x700] sm:$0xff] %v247
    %536 = vst [vmem:[#allocation5 + $0x708] sm:$0xff] %v248
    %537 = vst [vmem:[#allocation5 + $0x710] sm:$0xff] %v249
    %538 = vst [vmem:[#allocation5 + $0x718] sm:$0xff] %v250
    %539 = vst [vmem:[#allocation5 + $0x720] sm:$0xff] %v251
    %540 = vst [vmem:[#allocation5 + $0x728] sm:$0xff] %v252
    %541 = vst [vmem:[#allocation5 + $0x730] sm:$0xff] %v253
    %542 = vst [vmem:[#allocation5 + $0x738] sm:$0xff] %v254
    %543 = vst [vmem:[#allocation5 + $0x740] sm:$0xff] %v255
    %544 = vst [vmem:[#allocation5 + $0x748] sm:$0xff] %v256
    %545 = vst [vmem:[#allocation5 + $0x750] sm:$0xff] %v257
    %546 = vst [vmem:[#allocation5 + $0x758] sm:$0xff] %v258
    %547 = vst [vmem:[#allocation5 + $0x760] sm:$0xff] %v259
    %548 = vst [vmem:[#allocation5 + $0x768] sm:$0xff] %v260
    %549 = vst [vmem:[#allocation5 + $0x770] sm:$0xff] %v261
    %550 = vst [vmem:[#allocation5 + $0x778] sm:$0xff] %v262
    %551 = vst [vmem:[#allocation5 + $0x780] sm:$0xff] %v263
    %552 = vst [vmem:[#allocation5 + $0x788] sm:$0xff] %v264
    %553 = vst [vmem:[#allocation5 + $0x790] sm:$0xff] %v265
    %554 = vst [vmem:[#allocation5 + $0x798] sm:$0xff] %v266
    %555 = vst [vmem:[#allocation5 + $0x7a0] sm:$0xff] %v267
    %556 = vst [vmem:[#allocation5 + $0x7a8] sm:$0xff] %v268
    %557 = vst [vmem:[#allocation5 + $0x7b0] sm:$0xff] %v269
    %558 = vst [vmem:[#allocation5 + $0x7b8] sm:$0xff] %v270
    %559 = vst [vmem:[#allocation5 + $0x7c0] sm:$0xff] %v271
    %560 = vst [vmem:[#allocation5 + $0x7c8] sm:$0xff] %v272
    %561 = vst [vmem:[#allocation5 + $0x7d0] sm:$0xff] %v273
    %562 = vst [vmem:[#allocation5 + $0x7d8] sm:$0xff] %v274
    %563 = vst [vmem:[#allocation5 + $0x7e0] sm:$0xff] %v275
    %564 = vst [vmem:[#allocation5 + $0x7e8] sm:$0xff] %v276
    %565 = vst [vmem:[#allocation5 + $0x7f0] sm:$0xff] %v277
    %566 = vst [vmem:[#allocation5 + $0x7f8] sm:$0xff] %v278
    %567 = vst [vmem:[#allocation5 + $0x800] sm:$0xff] %v279
    %568 = vst [vmem:[#allocation5 + $0x808] sm:$0xff] %v280
    %569 = vst [vmem:[#allocation5 + $0x810] sm:$0xff] %v281
    %570 = vst [vmem:[#allocation5 + $0x818] sm:$0xff] %v282
    %571 = vst [vmem:[#allocation5 + $0x820] sm:$0xff] %v283
    %572 = vst [vmem:[#allocation5 + $0x828] sm:$0xff] %v284
    %573 = vst [vmem:[#allocation5 + $0x830] sm:$0xff] %v285
    %574 = vst [vmem:[#allocation5 + $0x838] sm:$0xff] %v286
    %575 = vst [vmem:[#allocation5 + $0x840] sm:$0xff] %v287
    %576 = vst [vmem:[#allocation5 + $0x848] sm:$0xff] %v288
    %577 = vst [vmem:[#allocation5 + $0x850] sm:$0xff] %v289
    %578 = vst [vmem:[#allocation5 + $0x858] sm:$0xff] %v290
    %579 = vst [vmem:[#allocation5 + $0x860] sm:$0xff] %v291
    %580 = vst [vmem:[#allocation5 + $0x868] sm:$0xff] %v292
    %581 = vst [vmem:[#allocation5 + $0x870] sm:$0xff] %v293
    %582 = vst [vmem:[#allocation5 + $0x878] sm:$0xff] %v294
    %583 = vst [vmem:[#allocation5 + $0x880] sm:$0xff] %v295
    %584 = vst [vmem:[#allocation5 + $0x888] sm:$0xff] %v296
    %585 = vst [vmem:[#allocation5 + $0x890] sm:$0xff] %v297
    %586 = vst [vmem:[#allocation5 + $0x898] sm:$0xff] %v298
    %587 = vst [vmem:[#allocation5 + $0x8a0] sm:$0xff] %v299
    %588 = vst [vmem:[#allocation5 + $0x8a8] sm:$0xff] %v300
    %589 = vst [vmem:[#allocation5 + $0x8b0] sm:$0xff] %v301
    %590 = vst [vmem:[#allocation5 + $0x8b8] sm:$0xff] %v302
    %591 = vst [vmem:[#allocation5 + $0x8c0] sm:$0xff] %v303
    %592 = vst [vmem:[#allocation5 + $0x8c8] sm:$0xff] %v304
    %593 = vst [vmem:[#allocation5 + $0x8d0] sm:$0xff] %v305
    %594 = vst [vmem:[#allocation5 + $0x8d8] sm:$0xff] %v306
    %595 = vst [vmem:[#allocation5 + $0x8e0] sm:$0xff] %v307
    %596 = vst [vmem:[#allocation5 + $0x8e8] sm:$0xff] %v308
    %597 = vst [vmem:[#allocation5 + $0x8f0] sm:$0xff] %v309
    %598 = vst [vmem:[#allocation5 + $0x8f8] sm:$0xff] %v310
    // Predicated region
    $region10: #{tpu_custom_call.1} parent=1 // pred_check
      _
    $region11: #{tpu_custom_call.1} parent=1 // pred_check_branch
      %600 = sbr.rel (0) target = $region13
    $region12: #{tpu_custom_call.1} parent=1 // pred_region
      %s602 = ssub.s32 36864, 36864
      %603 = vsyncadd [#allocation4], %s602
      %s604 = sshll.u32 [#allocation5], 4
      %s605 = int_to_ptr.vmem [resolvable:$true] %s604
      %610 = dma.vmem_to_hbm [thread:$0]  %s605, 36864, %s1, [#allocation4], 768, 768, 48
    $region13: #{tpu_custom_call.1} parent=1 // pred_fallthru
      _
    // Predicated region
    $region14: #{tpu_custom_call.1} parent=1 // pred_check
      _
    $region15: #{tpu_custom_call.1} parent=1 // pred_check_branch
      %612 = sbr.rel (0) target = $region17
    $region16: #{tpu_custom_call.1} parent=1 // pred_region
      %613 = dma.done [#allocation4], 36864
    $region17: #{tpu_custom_call.1} parent=1 // pred_fallthru
      _
    %614 = vsyncpa [#allocation3], 1
    %615 = vsyncpa [#allocation4], 1

</llo_original>
